<compile_context>
chip_gen: v5e
topology: v5e:2x2
jax: 0.10.0
libtpu: 0.0.40
codegen_flags: <defaults>
</compile_context>

<pallas_src>
import jax
import jax.numpy as jnp
from jax.experimental import pallas as pl
from jax.experimental.pallas import tpu as pltpu


_TILE_BUDGET_BYTES = 4 * 1024 * 1024   # per-tile target; 4x resident fits 32 MiB scoped VMEM
_LANE_TARGET = 8192                    # grow the lane (contiguous) dim first
_VMEM_LIMIT_BYTES = 32 * 1024 * 1024   # safe on v5e/v6e/v7x, raises v5e's 16 MiB default


def _sublane_unit(dtype) -> int:
    """Minimum sublane multiple for a dtype: 8 (f32), 16 (bf16/f16), 32 (int8/fp8)."""
    itemsize = jnp.dtype(dtype).itemsize
    return max(8, 32 // max(itemsize, 1))


def _pick_block(dim: int, unit: int, target: int) -> int:
    """Largest multiple of `unit` that is <= target, capped at round_up(dim, unit).

    If dim < unit, the full dimension is used (always a legal block shape).
    The caller uses a cdiv grid, so `dim` need not be divisible by the result;
    only the final edge block is masked.
    """
    if dim <= unit:
        return dim
    cap = min(max(target, unit), pl.cdiv(dim, unit) * unit)
    return (cap // unit) * unit


def _ensure_multi_step(R: int, S: int, block_r: int, block_s: int, sub: int):
    """Give the 'parallel' grid >= 2 steps when possible (v7x megacore split)."""
    if pl.cdiv(R, block_r) * pl.cdiv(S, block_s) >= 2:
        return block_r, block_s
    if block_r >= 2 * sub:
        block_r = max(sub, ((block_r // 2) // sub) * sub)
    elif block_s >= 256:
        block_s = max(128, ((block_s // 2) // 128) * 128)
    return block_r, block_s


def film_modulate_kernel(gb_ref, x_ref, o_ref):
    # gb_ref: (block_r, 2) per-row [gamma, beta] scalars, j-invariant (resident
    # across the lane-tile axis).  Pure streaming FMA on the VPU.
    gamma = gb_ref[:, 0:1]
    beta = gb_ref[:, 1:2]
    o_ref[...] = (gamma * x_ref[...] + beta).astype(o_ref.dtype)


def film_forward(x_nchw, condition, params, *, min_pallas_bytes: int = 1 << 20):
    """FiLM forward: gamma * x + beta with (gamma, beta) produced from `condition`."""
    w1, b1, w2, b2 = params["w1"], params["b1"], params["w2"], params["b2"]
    B, C, H, W = x_nchw.shape
    S = H * W
    R = B * C

    # --- FiLM generator MLP: hoisted out of the grid loop (tiny, done once). ---
    h = jnp.maximum(condition @ w1 + b1, 0.0)
    p = (h @ w2 + b2).astype(jnp.float32)                 # (B, 2C)
    gamma_flat = p[:, :C].reshape(R)                      # row r = b*C + c
    beta_flat = p[:, C:].reshape(R)

    itemsize = jnp.dtype(x_nchw.dtype).itemsize

    # Tiny activations: a fused XLA broadcast-FMA beats pallas_call fixed overhead.
    if R * S * itemsize < min_pallas_bytes:
        gamma4 = gamma_flat.reshape(B, C, 1, 1)
        beta4 = beta_flat.reshape(B, C, 1, 1)
        return (gamma4 * x_nchw + beta4).astype(x_nchw.dtype)

    # Fused (gamma, beta) slab: one narrow j-invariant DMA per row-block.
    gb = jnp.stack([gamma_flat, beta_flat], axis=-1)      # (R, 2) f32

    # --- Keep NCHW: view x as a lane-dense (B*C, H*W) slab (free reshape). ---
    x2d = x_nchw.reshape(R, S)

    # Tile sizing: lane (contiguous) dim first, then fill rows to ~4 MiB/tile.
    sub = _sublane_unit(x_nchw.dtype)
    block_s = _pick_block(S, 128, _LANE_TARGET)
    bytes_per_row = block_s * itemsize
    max_rows = max(sub, _TILE_BUDGET_BYTES // max(bytes_per_row, 1))
    block_r = _pick_block(R, sub, max_rows)
    block_r, block_s = _ensure_multi_step(R, S, block_r, block_s, sub)

    grid = (pl.cdiv(R, block_r), pl.cdiv(S, block_s))

    out2d = pl.pallas_call(
        film_modulate_kernel,
        out_shape=jax.ShapeDtypeStruct((R, S), x_nchw.dtype),
        grid_spec=pltpu.PrefetchScalarGridSpec(
            num_scalar_prefetch=0,
            grid=grid,
            in_specs=[
                pl.BlockSpec((block_r, 2), lambda i, j: (i, 0)),        # [gamma, beta]
                pl.BlockSpec((block_r, block_s), lambda i, j: (i, j)),  # x tile
            ],
            out_specs=pl.BlockSpec((block_r, block_s), lambda i, j: (i, j)),
        ),
        compiler_params=pltpu.CompilerParams(
            dimension_semantics=("parallel", "parallel"),
            vmem_limit_bytes=_VMEM_LIMIT_BYTES,
        ),
    )(gb, x2d)

    # (B*C, H*W) -> NCHW (free reshape).
    return out2d.reshape(B, C, H, W)


def film_reference(x_nchw, condition, params):
    """Pure-JAX reference reproducing the PyTorch forward exactly."""
    h = jnp.maximum(condition @ params["w1"] + params["b1"], 0.0)
    p = h @ params["w2"] + params["b2"]
    C = x_nchw.shape[1]
    gamma = p[:, :C].reshape(-1, C, 1, 1)
    beta = p[:, C:].reshape(-1, C, 1, 1)
    return gamma * x_nchw + beta


if __name__ == "__main__":
    # Small shapes consistent with the module's forward.
    B, C, H, W = 2, 4, 16, 16
    cond_size, hidden = 8, 32

    key = jax.random.PRNGKey(0)
    kx, kc, k1, k2, k3, k4 = jax.random.split(key, 6)

    x = jax.random.normal(kx, (B, C, H, W), dtype=jnp.float32)
    condition = jax.random.normal(kc, (B, cond_size), dtype=jnp.float32)

    # Parameters stored as [in, out] so y = x @ W + b (== PyTorch y = x @ weight.T + bias).
    # NOTE: the PyTorch __init__ zero-initializes the second Linear, which would make the
    # forward output identically zero; we use small random values so the numerical check
    # actually exercises the kernel.
    params = {
        "w1": 0.1 * jax.random.normal(k1, (cond_size, hidden), dtype=jnp.float32),
        "b1": 0.1 * jax.random.normal(k2, (1, hidden), dtype=jnp.float32),
        "w2": 0.1 * jax.random.normal(k3, (hidden, 2 * C), dtype=jnp.float32),
        "b2": 0.1 * jax.random.normal(k4, (1, 2 * C), dtype=jnp.float32),
    }

    # min_pallas_bytes=0 forces the Pallas path even at this tiny demo size so the
    # kernel itself is compiled, run, and numerically checked.
    out = film_forward(x, condition, params, min_pallas_bytes=0)
    jax.block_until_ready(out)

    ref = film_reference(x, condition, params)
    assert out.shape == (B, C, H, W)
    assert jnp.allclose(out, ref, atol=1e-5, rtol=1e-5), "Pallas output mismatch vs reference"

    # Also exercise the small-input XLA fallback path (default threshold).
    out_small = film_forward(x, condition, params)
    jax.block_until_ready(out_small)
    assert jnp.allclose(out_small, ref, atol=1e-5, rtol=1e-5), "fallback path mismatch"

    print("KERNEL_OK")
</pallas_src>

<mosaic_0001>
module attributes {stable_mosaic.version = 11 : i64} {
  func.func @film_modulate_kernel(%arg0: i32, %arg1: i32, %arg2: memref<8x2xf32, #tpu.memory_space<vmem>>, %arg3: memref<8x128xf32, #tpu.memory_space<vmem>>, %arg4: memref<8x128xf32, #tpu.memory_space<vmem>>) attributes {dimension_semantics = [#tpu.dimension_semantics<parallel>, #tpu.dimension_semantics<parallel>], iteration_bounds = array<i64: 1, 2>, scalar_prefetch = 0 : i64, scratch_operands = 0 : i64, tpu.core_type = #tpu.core_type<tc>, window_params = [{transform_indices = @transform_0, window_bounds = array<i64: 8, 2>}, {transform_indices = @transform_1, window_bounds = array<i64: 8, 128>}, {transform_indices = @transform_2, window_bounds = array<i64: 8, 128>}]} {
    %c0 = arith.constant 0 : index
    %c0_0 = arith.constant 0 : index
    %0 = vector.load %arg2[%c0, %c0_0] : memref<8x2xf32, #tpu.memory_space<vmem>>, vector<8x1xf32>
    %c0_1 = arith.constant 0 : index
    %c1 = arith.constant 1 : index
    %1 = vector.load %arg2[%c0_1, %c1] : memref<8x2xf32, #tpu.memory_space<vmem>>, vector<8x1xf32>
    %c0_2 = arith.constant 0 : index
    %c0_3 = arith.constant 0 : index
    %2 = vector.load %arg3[%c0_2, %c0_3] : memref<8x128xf32, #tpu.memory_space<vmem>>, vector<8x128xf32>
    %3 = vector.broadcast %0 : vector<8x1xf32> to vector<8x128xf32>
    %4 = arith.mulf %3, %2 : vector<8x128xf32>
    %5 = vector.broadcast %1 : vector<8x1xf32> to vector<8x128xf32>
    %6 = arith.addf %4, %5 : vector<8x128xf32>
    %c0_4 = arith.constant 0 : index
    %c0_5 = arith.constant 0 : index
    %7 = vector.load %arg4[%c0_4, %c0_5] : memref<8x128xf32, #tpu.memory_space<vmem>>, vector<8x128xf32>
    tpu.vector_store %arg4[%c0_4, %c0_5], %6 {strides = array<i32>} : memref<8x128xf32, #tpu.memory_space<vmem>>, vector<8x128xf32>,
    return
  }
  func.func @transform_0(%arg0: i32, %arg1: i32) -> (i32, i32) {
    %c0_i32 = arith.constant 0 : i32
    %c0_i32_0 = arith.constant 0 : i32
    return %arg0, %c0_i32 : i32, i32
  }
  func.func @transform_1(%arg0: i32, %arg1: i32) -> (i32, i32) {
    %c0_i32 = arith.constant 0 : i32
    return %arg0, %arg1 : i32, i32
  }
  func.func @transform_2(%arg0: i32, %arg1: i32) -> (i32, i32) {
    %c0_i32 = arith.constant 0 : i32
    return %arg0, %arg1 : i32, i32
  }
}

</mosaic_0001>

<llo_original>
// kernel: tpu_custom_call.1
$region0: #{tpu_custom_call.1}
  #allocation0 [shape = 'u32[]', space=smem, size = 0x4, offset = 0x4, fixed_abs, tag = 'smem constant byte address 0x4 - core index']
  #allocation1 [shape = 'u32[72,128]{1,0:T(1,128)}', space=vmem, size = 0x9000, scoped, tag = 'internal scratch']
  %s0 = inlined_call_operand.vmem [shape: f32[8,2], index: 0, kind: input, shape index: {}]
  %s1 = inlined_call_operand.hbm [shape: f32[8,256], index: 1, kind: input, shape index: {}]
  %s2 = inlined_call_operand.hbm [shape: f32[8,256], index: 2, kind: output, shape index: {}]
  %s3 = sld [smem:[#allocation0]]
  $region45: #{tpu_custom_call.1} parent=0
    _
  %s5 = ssub.s32 1, %s3
  %s6 = scalar_select 0, %s5, %s3
  $region1: #{tpu_custom_call.1} parent=0
    #allocation2 [shape = 'u8[8192]{0}', space=vmem, size = 0x2000, scoped, tag = 'input window, operand 1']
    #allocation3 [shape = 's32[2]{0}', space=sflag, size = 0x8, scoped, tag = 'scoped memory for tpu_custom_call.1']
    #allocation4 [shape = 's32[2]{0}', space=sflag, size = 0x8, scoped, tag = 'scoped memory for tpu_custom_call.1']
    #allocation5 [shape = 'u8[8192]{0}', space=vmem, size = 0x2000, scoped, tag = 'output window, operand 0']
    %7 = vsyncpa [#allocation3], 0
    %s8 = scalar_lea.sflag [#allocation3], 1
    %9 = vsyncpa %s8, 0
    %10 = vsyncpa [#allocation4], 0
    %s11 = scalar_lea.sflag [#allocation4], 1
    %12 = vsyncpa %s11, 0
    loop: start=0, step=1, limit=4
    $region2: #{tpu_custom_call.1} parent=1 // loop_pre_header
      _
    $region3: #{tpu_custom_call.1} parent=1 // loop_header
      %s14 = sphi 0, %s18
      %p15 = scmp.ge.s32.totalorder %s14, 4
      %s21 = sphi 0, %s33
      %s22 = sphi 0, %s29
      %s23 = sphi 0, %s21
      %s24 = sphi 0, %s22
      %s25 = sphi 0, %s23
      %s26 = sphi 0, %s24
      %s36 = sphi 0, %s38
      %s39 = sphi 0, %s36
      %s40 = sphi 0, %s39
      %s56 = sphi 0, %s40
      %s64 = sphi 0, %s66
      %s67 = sphi 0, %s64
      %s68 = sphi 0, %s67
      %s84 = sphi 0, %s68
      %s92 = sphi 0, %s94
      %s95 = sphi 0, %s92
      %s96 = sphi 0, %s95
      %s112 = sphi 0, %s96
    $region4: #{tpu_custom_call.1} parent=1 // loop_header_branch
      %17 = sbr.rel (%p15) target = $region8
    $region5: #{tpu_custom_call.1} parent=1 // loop_body
      %s19 = ssub.s32 %s14, 1
      %s20 = ssub.s32 %s14, 2
      %s27 = sadd.s32 1, %s22
      %p28 = scmp.ge.s32.totalorder %s27, 2
      %s29 = scalar_select %p28, 0, %s27
      %s30 = sadd.s32 1, %s21
      %s31 = scalar_select %p28, %s30, %s21
      %p32 = scmp.ge.s32.totalorder %s31, 1
      %s33 = scalar_select %p32, 0, %s31
      %s34 = ssub.s32 %s21, %s33
      %p35 = scmp.eq.s32.totalorder %s34, 0
      %s37 = sadd.s32 %s36, 1
      %s38 = scalar_select %p35, %s36, %s37
      %p41 = pneg %p35
      %p42 = scmp.eq.s32.totalorder %s14, 1
      %p43 = por %p41, %p42
      %p44 = scmp.ne.s32.totalorder %s36, %s39
      %p45 = scmp.eq.s32.totalorder %s14, 0
      %p46 = por %p44, %p45
      %p47 = scmp.ne.s32.totalorder %s36, %s39
      %p48 = scmp.eq.s32.totalorder %s19, 1
      %p49 = por %p47, %p48
      %p50 = scmp.ne.s32.totalorder %s39, %s40
      %p51 = scmp.eq.s32.totalorder %s19, 0
      %p52 = por %p50, %p51
      %p53 = scmp.ne.s32.totalorder %s39, %s40
      %p54 = scmp.eq.s32.totalorder %s20, 1
      %p55 = por %p53, %p54
      %p57 = scmp.ne.s32.totalorder %s40, %s56
      %p58 = scmp.eq.s32.totalorder %s20, 0
      %p59 = por %p57, %p58
      %s60 = ssub.s32 %s21, %s33
      %s61 = ssub.s32 %s22, %s29
      %s62 = sor.u32 %s60, %s61
      %p63 = scmp.eq.s32.totalorder %s62, 0
      %s65 = sadd.s32 %s64, 1
      %s66 = scalar_select %p63, %s64, %s65
      %p69 = pneg %p63
      %p70 = scmp.eq.s32.totalorder %s14, 1
      %p71 = por %p69, %p70
      %p72 = scmp.ne.s32.totalorder %s64, %s67
      %p73 = scmp.eq.s32.totalorder %s14, 0
      %p74 = por %p72, %p73
      %p75 = scmp.ne.s32.totalorder %s64, %s67
      %p76 = scmp.eq.s32.totalorder %s19, 1
      %p77 = por %p75, %p76
      %p78 = scmp.ne.s32.totalorder %s67, %s68
      %p79 = scmp.eq.s32.totalorder %s19, 0
      %p80 = por %p78, %p79
      %p81 = scmp.ne.s32.totalorder %s67, %s68
      %p82 = scmp.eq.s32.totalorder %s20, 1
      %p83 = por %p81, %p82
      %p85 = scmp.ne.s32.totalorder %s68, %s84
      %p86 = scmp.eq.s32.totalorder %s20, 0
      %p87 = por %p85, %p86
      %s88 = ssub.s32 %s21, %s33
      %s89 = ssub.s32 %s22, %s29
      %s90 = sor.u32 %s88, %s89
      %p91 = scmp.eq.s32.totalorder %s90, 0
      %s93 = sadd.s32 %s92, 1
      %s94 = scalar_select %p91, %s92, %s93
      %p97 = pneg %p91
      %p98 = scmp.eq.s32.totalorder %s14, 1
      %p99 = por %p97, %p98
      %p100 = scmp.ne.s32.totalorder %s92, %s95
      %p101 = scmp.eq.s32.totalorder %s14, 0
      %p102 = por %p100, %p101
      %p103 = scmp.ne.s32.totalorder %s92, %s95
      %p104 = scmp.eq.s32.totalorder %s19, 1
      %p105 = por %p103, %p104
      %p106 = scmp.ne.s32.totalorder %s95, %s96
      %p107 = scmp.eq.s32.totalorder %s19, 0
      %p108 = por %p106, %p107
      %p109 = scmp.ne.s32.totalorder %s95, %s96
      %p110 = scmp.eq.s32.totalorder %s20, 1
      %p111 = por %p109, %p110
      %p113 = scmp.ne.s32.totalorder %s96, %s112
      %p114 = scmp.eq.s32.totalorder %s20, 0
      %p115 = por %p113, %p114
      %p116 = scmp.le.s32.totalorder 1, %s14
      %p117 = scmp.lt.s32.totalorder %s14, 3
      %p118 = pnand %p116, %p117
      %p119 = pneg %p118
      // Predicated region
      $region9: #{tpu_custom_call.1} parent=5 // pred_check
        _
      $region10: #{tpu_custom_call.1} parent=5 // pred_check_branch
        %121 = sbr.rel (%p118) target = $region12
      $region11: #{tpu_custom_call.1} parent=5 // pred_region
        %s122 = ssub.s32 %s14, 1
        // Predicated region
        $region13: #{tpu_custom_call.1} parent=11 // pred_check
          %p123 = pneg %p52
        $region14: #{tpu_custom_call.1} parent=11 // pred_check_branch
          %125 = sbr.rel (%p123) target = $region16
        $region15: #{tpu_custom_call.1} parent=11 // pred_region
          %p126 = scmp.lt.s32.totalorder %s23, 0
          %s127 = scalar_select %p126, %s23, 0
          %s128 = smul.addr %s127, 8
          %s129 = scalar_lea.vmem %s0, %s128
        $region16: #{tpu_custom_call.1} parent=11 // pred_fallthru
          _
      $region12: #{tpu_custom_call.1} parent=5 // pred_fallthru
        _
      %p130 = scmp.lt.s32.totalorder %s14, 2
      // Predicated region
      $region17: #{tpu_custom_call.1} parent=5 // pred_check
        %p131 = pneg %p130
      $region18: #{tpu_custom_call.1} parent=5 // pred_check_branch
        %133 = sbr.rel (%p131) target = $region20
      $region19: #{tpu_custom_call.1} parent=5 // pred_region
        // Predicated region
        $region21: #{tpu_custom_call.1} parent=19 // pred_check
          %p134 = pneg %p74
        $region22: #{tpu_custom_call.1} parent=19 // pred_check_branch
          %136 = sbr.rel (%p134) target = $region24
        $region23: #{tpu_custom_call.1} parent=19 // pred_region
          %s137 = sand.u32 %s64, 1
          %s138 = scalar_lea.sflag [#allocation3], %s137
          %s139 = sand.u32 %s64, 1
          %s140 = smul.addr %s139, 8
          %s141 = scalar_lea.vmem [#allocation2], %s140
          %143 = vsyncadd %s138, 0
          %s144 = smul.addr %s21, 2
          %s145 = sadd.s32 %s22, %s144
          %s146 = smul.addr %s145, 8
          %s147 = scalar_lea.hbm %s1, %s146
          %s149 = sshll.u32 %s147, 4
          %s150 = int_to_ptr.hbm [resolvable:$true] %s149
          %s151 = sshll.u32 %s141, 4
          %s152 = int_to_ptr.vmem [resolvable:$true] %s151
          %154 = dma.hbm_to_vmem [thread:$0]  %s150, 128, %s152, %s138
        $region24: #{tpu_custom_call.1} parent=19 // pred_fallthru
          _
      $region20: #{tpu_custom_call.1} parent=5 // pred_fallthru
        _
      %p155 = scmp.le.s32.totalorder 1, %s14
      %p156 = scmp.lt.s32.totalorder %s14, 3
      %p157 = pnand %p155, %p156
      %p158 = pneg %p157
      // Predicated region
      $region25: #{tpu_custom_call.1} parent=5 // pred_check
        _
      $region26: #{tpu_custom_call.1} parent=5 // pred_check_branch
        %160 = sbr.rel (%p157) target = $region28
      $region27: #{tpu_custom_call.1} parent=5 // pred_region
        %s161 = ssub.s32 %s14, 1
        %s162 = sand.u32 %s67, 1
        %s163 = scalar_lea.sflag [#allocation3], %s162
        %s164 = sand.u32 %s67, 1
        %s165 = smul.addr %s164, 8
        %s166 = scalar_lea.vmem [#allocation2], %s165
        // Predicated region
        $region29: #{tpu_custom_call.1} parent=27 // pred_check
          %p167 = pneg %p80
        $region30: #{tpu_custom_call.1} parent=27 // pred_check_branch
          %169 = sbr.rel (%p167) target = $region32
        $region31: #{tpu_custom_call.1} parent=27 // pred_region
          %171 = dma.done %s163, 128
        $region32: #{tpu_custom_call.1} parent=27 // pred_fallthru
          _
        %p172 = scmp.lt.s32.totalorder %s23, 0
        %s173 = scalar_select %p172, %s23, 0
        %s174 = smul.addr %s173, 8
        %s175 = scalar_lea.vmem %s0, %s174
        %p176 = pneg %p52
        %p177 = pneg %p49
        %s178 = sand.u32 %s67, 1
        %s179 = scalar_lea.sflag [#allocation3], %s178
        %s180 = sand.u32 %s67, 1
        %s181 = smul.addr %s180, 8
        %s182 = scalar_lea.vmem [#allocation2], %s181
        %p183 = pneg %p80
        %p184 = pneg %p77
        %p185 = pneg %p108
        %p186 = pneg %p105
        %s187 = sand.u32 %s95, 1
        %s188 = scalar_lea.sflag [#allocation4], %s187
        %s189 = sand.u32 %s95, 1
        %s190 = smul.addr %s189, 8
        %s191 = scalar_lea.vmem [#allocation5], %s190
        %p192 = scmp.lt.s32.totalorder %s23, 0
        %s193 = scalar_select %p192, %s23, 0
        %s194 = smul.addr %s193, 8
        %s195 = scalar_lea.vmem %s0, %s194
        %v196 = vld [vmem:[%s195] sm:$0xff]
        %v197 = vld [vmem:[%s166] sm:$0xff]
        %199 = vset.pattern.permute.xlu0 0
        %200 = vperm.xlu0 %199, %v196
        %v201 = vpop.permute.xlu0 %200
        %v203 = vmul.f32 %v201, %v197
        %204 = vset.pattern.permute.xlu0 1
        %205 = vperm.xlu0 %204, %v196
        %v206 = vpop.permute.xlu0 %205
        %v208 = vadd.f32 %v203, %v206
        %209 = vst [vmem:[%s191] sm:$0xff] %v208
        %s210 = sand.u32 %s95, 1
        %s211 = scalar_lea.sflag [#allocation4], %s210
        %s212 = sand.u32 %s95, 1
        %s213 = smul.addr %s212, 8
        %s214 = scalar_lea.vmem [#allocation5], %s213
        // Predicated region
        $region33: #{tpu_custom_call.1} parent=27 // pred_check
          %p215 = pneg %p105
        $region34: #{tpu_custom_call.1} parent=27 // pred_check_branch
          %217 = sbr.rel (%p215) target = $region36
        $region35: #{tpu_custom_call.1} parent=27 // pred_region
          %219 = vsyncadd %s211, 0
          %s220 = smul.addr %s23, 2
          %s221 = sadd.s32 %s24, %s220
          %s222 = smul.addr %s221, 8
          %s223 = scalar_lea.hbm %s2, %s222
          %s225 = sshll.u32 %s214, 4
          %s226 = int_to_ptr.vmem [resolvable:$true] %s225
          %s227 = sshll.u32 %s223, 4
          %s228 = int_to_ptr.hbm [resolvable:$true] %s227
          %230 = dma.vmem_to_hbm [thread:$0]  %s226, 128, %s228, %s211
        $region36: #{tpu_custom_call.1} parent=27 // pred_fallthru
          _
      $region28: #{tpu_custom_call.1} parent=5 // pred_fallthru
        _
      %p231 = scmp.le.s32.totalorder 2, %s14
      // Predicated region
      $region37: #{tpu_custom_call.1} parent=5 // pred_check
        %p232 = pneg %p231
      $region38: #{tpu_custom_call.1} parent=5 // pred_check_branch
        %234 = sbr.rel (%p232) target = $region40
      $region39: #{tpu_custom_call.1} parent=5 // pred_region
        %s235 = ssub.s32 %s14, 2
        // Predicated region
        $region41: #{tpu_custom_call.1} parent=39 // pred_check
          %p236 = pneg %p111
        $region42: #{tpu_custom_call.1} parent=39 // pred_check_branch
          %238 = sbr.rel (%p236) target = $region44
        $region43: #{tpu_custom_call.1} parent=39 // pred_region
          %s239 = sand.u32 %s96, 1
          %s240 = scalar_lea.sflag [#allocation4], %s239
          %s241 = sand.u32 %s96, 1
          %s242 = smul.addr %s241, 8
          %s243 = scalar_lea.vmem [#allocation5], %s242
          %245 = dma.done %s240, 128
        $region44: #{tpu_custom_call.1} parent=39 // pred_fallthru
          _
      $region40: #{tpu_custom_call.1} parent=5 // pred_fallthru
        _
    $region6: #{tpu_custom_call.1} parent=1 // loop_footer
      %s18 = sadd.s32 1, %s14
    $region7: #{tpu_custom_call.1} parent=1 // loop_footer_branch
      %13 = sbr.rel target = $region3
    $region8: #{tpu_custom_call.1} parent=1 // loop_exit
      _
    %246 = vsyncpa [#allocation3], 1
    %s247 = scalar_lea.sflag [#allocation3], 1
    %248 = vsyncpa %s247, 1
    %249 = vsyncpa [#allocation4], 1
    %s250 = scalar_lea.sflag [#allocation4], 1
    %251 = vsyncpa %s250, 1

</llo_original>
